<compile_context>
chip_gen: v5e
topology: v5e:2x2
jax: 0.10.0
libtpu: 0.0.40
codegen_flags: <defaults>
</compile_context>

<pallas_src>
import math
import functools

import jax
import jax.numpy as jnp
from jax import lax
from jax.experimental import pallas as pl
from jax.experimental.pallas import tpu as pltpu


# ----------------------------------------------------------------------------
# Fused kernel: one grid step = one batch element.
#   QKV projection (all heads at once) -> per-head attention -> head concat
#   -> output projection, all in VMEM/registers.
# ----------------------------------------------------------------------------
def fused_mha_kernel(q_ref, k_ref, v_ref,
                     wq_ref, bq_ref, wk_ref, bk_ref, wv_ref, bv_ref,
                     wo_ref, bo_ref,
                     o_ref, *, nhead, head_size, mxu_dtype):
    # q_ref: (1, T, A)   k_ref/v_ref: (1, S, A)
    # w*_ref: (A, A) pre-transposed (y = x @ W + b), heads concatenated along
    #         the output axis.   b*_ref: (1, A)
    # o_ref: (1, T, A)  -- lane-dense output block.
    D = head_size

    q = q_ref[0]                      # [T, A]
    k = k_ref[0]                      # [S, A]
    v = v_ref[0]                      # [S, A]

    def mxdot(a, b):
        # MXU matmul: (optionally bf16) operands, f32 accumulation.
        return jnp.dot(a.astype(mxu_dtype), b.astype(mxu_dtype),
                       preferred_element_type=jnp.float32)

    # All-head projections: one [.,A]@[A,A] MXU push per input (not 3*H tiny ones).
    qh = mxdot(q, wq_ref[...]) + bq_ref[...]          # [T, A] f32
    kh = mxdot(k, wk_ref[...]) + bk_ref[...]          # [S, A] f32
    vh = mxdot(v, wv_ref[...]) + bv_ref[...]          # [S, A] f32

    # Fold the 1/sqrt(D) score scale into qh once (instead of per-head scores).
    qh = qh * (1.0 / math.sqrt(D))

    contract_last = (((1,), (1,)), ((), ()))          # contract D of both, no .T

    head_outs = []
    for h in range(nhead):                            # static unroll over heads
        sl = slice(h * D, (h + 1) * D)
        qh_h = qh[:, sl]                              # [T, D]
        kh_h = kh[:, sl]                              # [S, D]
        vh_h = vh[:, sl]                              # [S, D]

        scores = lax.dot_general(qh_h.astype(mxu_dtype), kh_h.astype(mxu_dtype),
                                 contract_last,
                                 preferred_element_type=jnp.float32)   # [T, S]

        # Numerically-stable softmax over S; all f32 (VPU), reciprocal on EUP.
        m = jnp.max(scores, axis=-1, keepdims=True)
        p = jnp.exp(scores - m)
        p = p * pl.reciprocal(jnp.sum(p, axis=-1, keepdims=True), approx=True)

        head_outs.append(mxdot(p, vh_h))              # [T, D] f32

    concat = jnp.concatenate(head_outs, axis=-1)      # [T, A] in-register concat

    out = mxdot(concat, wo_ref[...]) + bo_ref[...]    # [T, A]  (o_proj fused)
    o_ref[0] = out.astype(o_ref.dtype)                # lane-dense store


# ----------------------------------------------------------------------------
# Wrapper
# ----------------------------------------------------------------------------
def multi_head_attention(queries, keys, values, params, *, nhead, head_size,
                         mxu_dtype=jnp.bfloat16):
    """Returns (values, None), matching forward(..., output_weights=False)."""
    B, T, A = queries.shape
    _, S, _ = keys.shape
    assert A == nhead * head_size

    Wq, bq = params["Wq"], params["bq"]   # [A, A], [1, A]  (heads concat on out axis)
    Wk, bk = params["Wk"], params["bk"]
    Wv, bv = params["Wv"], params["bv"]
    Wo, bo = params["Wo"], params["bo"]   # [A, A], [1, A]  (pre-transposed)

    out = pl.pallas_call(
        functools.partial(fused_mha_kernel, nhead=nhead, head_size=head_size,
                          mxu_dtype=mxu_dtype),
        out_shape=jax.ShapeDtypeStruct((B, T, A), jnp.float32),
        grid_spec=pltpu.PrefetchScalarGridSpec(
            num_scalar_prefetch=0,
            grid=(B,),
            in_specs=[
                pl.BlockSpec((1, T, A), lambda b: (b, 0, 0)),   # queries
                pl.BlockSpec((1, S, A), lambda b: (b, 0, 0)),   # keys
                pl.BlockSpec((1, S, A), lambda b: (b, 0, 0)),   # values
                pl.BlockSpec((A, A), lambda b: (0, 0)),         # Wq (all heads)
                pl.BlockSpec((1, A), lambda b: (0, 0)),         # bq
                pl.BlockSpec((A, A), lambda b: (0, 0)),         # Wk
                pl.BlockSpec((1, A), lambda b: (0, 0)),         # bk
                pl.BlockSpec((A, A), lambda b: (0, 0)),         # Wv
                pl.BlockSpec((1, A), lambda b: (0, 0)),         # bv
                pl.BlockSpec((A, A), lambda b: (0, 0)),         # Wo
                pl.BlockSpec((1, A), lambda b: (0, 0)),         # bo
            ],
            out_specs=pl.BlockSpec((1, T, A), lambda b: (b, 0, 0)),
        ),
        compiler_params=pltpu.CompilerParams(
            dimension_semantics=("parallel",)),   # shards B across v7x's 2 TCs
    )(queries, keys, values, Wq, bq, Wk, bk, Wv, bv, Wo, bo)

    return out, None


# ----------------------------------------------------------------------------
# Pure-JAX reference (for a correctness check)
# ----------------------------------------------------------------------------
def reference(queries, keys, values, params, *, nhead, head_size):
    B, T, A = queries.shape
    S = keys.shape[1]
    D = head_size
    qh = queries @ params["Wq"] + params["bq"]             # [B, T, A]
    kh = keys @ params["Wk"] + params["bk"]                # [B, S, A]
    vh = values @ params["Wv"] + params["bv"]              # [B, S, A]
    qh = qh.reshape(B, T, nhead, D).transpose(0, 2, 1, 3)  # [B, H, T, D]
    kh = kh.reshape(B, S, nhead, D).transpose(0, 2, 1, 3)
    vh = vh.reshape(B, S, nhead, D).transpose(0, 2, 1, 3)
    scores = jnp.einsum("bhtd,bhsd->bhts", qh, kh) / math.sqrt(D)
    p = jax.nn.softmax(scores, axis=-1)
    out = jnp.einsum("bhts,bhsd->bhtd", p, vh)             # [B, H, T, D]
    concat = out.transpose(0, 2, 1, 3).reshape(B, T, A)    # [B, T, A]
    return concat @ params["Wo"] + params["bo"]


# ----------------------------------------------------------------------------
if __name__ == "__main__":
    nhead = 4
    head_size = 8
    attn_size = nhead * head_size        # A = 32
    B, T, S = 2, 8, 8

    key = jax.random.PRNGKey(0)
    ks = jax.random.split(key, 11)

    queries = jax.random.normal(ks[0], (B, T, attn_size), dtype=jnp.float32)
    keys_in = jax.random.normal(ks[1], (B, S, attn_size), dtype=jnp.float32)
    values_in = jax.random.normal(ks[2], (B, S, attn_size), dtype=jnp.float32)

    # Deterministic synthetic parameters.  Per-head projection weights are
    # stored pre-transposed and concatenated along the output axis: [A, H*D]
    # = [A, A], so the kernel computes y = x @ W + b (== PyTorch x @ W_pt.T + b).
    scale = 1.0 / math.sqrt(attn_size)
    params = {
        "Wq": scale * jax.random.normal(ks[3], (attn_size, attn_size), jnp.float32),
        "bq": scale * jax.random.normal(ks[4], (1, attn_size), jnp.float32),
        "Wk": scale * jax.random.normal(ks[5], (attn_size, attn_size), jnp.float32),
        "bk": scale * jax.random.normal(ks[6], (1, attn_size), jnp.float32),
        "Wv": scale * jax.random.normal(ks[7], (attn_size, attn_size), jnp.float32),
        "bv": scale * jax.random.normal(ks[8], (1, attn_size), jnp.float32),
        "Wo": scale * jax.random.normal(ks[9], (attn_size, attn_size), jnp.float32),
        "bo": scale * jax.random.normal(ks[10], (1, attn_size), jnp.float32),
    }

    ref = reference(queries, keys_in, values_in, params,
                    nhead=nhead, head_size=head_size)

    # f32 MXU operands: tight check (approx reciprocal is the only deviation).
    out32, weights = multi_head_attention(queries, keys_in, values_in, params,
                                          nhead=nhead, head_size=head_size,
                                          mxu_dtype=jnp.float32)
    out32 = jax.block_until_ready(out32)
    assert out32.shape == (B, T, attn_size)
    assert weights is None
    assert jnp.allclose(out32, ref, atol=5e-3, rtol=5e-3), "f32 path mismatch"

    # bf16 MXU operands (v6e/v7x fast path): f32 accumulate + f32 softmax.
    out16, _ = multi_head_attention(queries, keys_in, values_in, params,
                                    nhead=nhead, head_size=head_size,
                                    mxu_dtype=jnp.bfloat16)
    out16 = jax.block_until_ready(out16)
    assert jnp.allclose(out16, ref, atol=5e-2, rtol=5e-2), "bf16 path mismatch"

    print("KERNEL_OK")
</pallas_src>

<mosaic_0001>
module attributes {stable_mosaic.version = 11 : i64} {
  func.func @fused_mha_kernel(%arg0: i32, %arg1: memref<1x8x32xf32, #tpu.memory_space<vmem>>, %arg2: memref<1x8x32xf32, #tpu.memory_space<vmem>>, %arg3: memref<1x8x32xf32, #tpu.memory_space<vmem>>, %arg4: memref<32x32xf32, #tpu.memory_space<vmem>>, %arg5: memref<1x32xf32, #tpu.memory_space<vmem>>, %arg6: memref<32x32xf32, #tpu.memory_space<vmem>>, %arg7: memref<1x32xf32, #tpu.memory_space<vmem>>, %arg8: memref<32x32xf32, #tpu.memory_space<vmem>>, %arg9: memref<1x32xf32, #tpu.memory_space<vmem>>, %arg10: memref<32x32xf32, #tpu.memory_space<vmem>>, %arg11: memref<1x32xf32, #tpu.memory_space<vmem>>, %arg12: memref<1x8x32xf32, #tpu.memory_space<vmem>>) attributes {dimension_semantics = [#tpu.dimension_semantics<parallel>], iteration_bounds = array<i64: 2>, scalar_prefetch = 0 : i64, scratch_operands = 0 : i64, tpu.core_type = #tpu.core_type<tc>, window_params = [{transform_indices = @transform_0, window_bounds = array<i64: 1, 8, 32>}, {transform_indices = @transform_1, window_bounds = array<i64: 1, 8, 32>}, {transform_indices = @transform_2, window_bounds = array<i64: 1, 8, 32>}, {pipeline_mode = #tpu.pipeline_mode<synchronous>, transform_indices = @transform_3, window_bounds = array<i64: 32, 32>}, {pipeline_mode = #tpu.pipeline_mode<synchronous>, transform_indices = @transform_4, window_bounds = array<i64: 1, 32>}, {pipeline_mode = #tpu.pipeline_mode<synchronous>, transform_indices = @transform_5, window_bounds = array<i64: 32, 32>}, {pipeline_mode = #tpu.pipeline_mode<synchronous>, transform_indices = @transform_6, window_bounds = array<i64: 1, 32>}, {pipeline_mode = #tpu.pipeline_mode<synchronous>, transform_indices = @transform_7, window_bounds = array<i64: 32, 32>}, {pipeline_mode = #tpu.pipeline_mode<synchronous>, transform_indices = @transform_8, window_bounds = array<i64: 1, 32>}, {pipeline_mode = #tpu.pipeline_mode<synchronous>, transform_indices = @transform_9, window_bounds = array<i64: 32, 32>}, {pipeline_mode = #tpu.pipeline_mode<synchronous>, transform_indices = @transform_10, window_bounds = array<i64: 1, 32>}, {transform_indices = @transform_11, window_bounds = array<i64: 1, 8, 32>}]} {
    %c0 = arith.constant 0 : index
    %c0_0 = arith.constant 0 : index
    %c0_1 = arith.constant 0 : index
    %0 = vector.load %arg1[%c0, %c0_0, %c0_1] : memref<1x8x32xf32, #tpu.memory_space<vmem>>, vector<1x8x32xf32>
    %1 = vector.shape_cast %0 : vector<1x8x32xf32> to vector<8x32xf32>
    %c0_2 = arith.constant 0 : index
    %c0_3 = arith.constant 0 : index
    %c0_4 = arith.constant 0 : index
    %2 = vector.load %arg2[%c0_2, %c0_3, %c0_4] : memref<1x8x32xf32, #tpu.memory_space<vmem>>, vector<1x8x32xf32>
    %3 = vector.shape_cast %2 : vector<1x8x32xf32> to vector<8x32xf32>
    %c0_5 = arith.constant 0 : index
    %c0_6 = arith.constant 0 : index
    %c0_7 = arith.constant 0 : index
    %4 = vector.load %arg3[%c0_5, %c0_6, %c0_7] : memref<1x8x32xf32, #tpu.memory_space<vmem>>, vector<1x8x32xf32>
    %5 = vector.shape_cast %4 : vector<1x8x32xf32> to vector<8x32xf32>
    %c0_8 = arith.constant 0 : index
    %c0_9 = arith.constant 0 : index
    %6 = vector.load %arg4[%c0_8, %c0_9] : memref<32x32xf32, #tpu.memory_space<vmem>>, vector<32x32xf32>
    %cst = arith.constant dense<0.000000e+00> : vector<8x32xf32>
    %7 = tpu.matmul %1, %6, %cst {dimension_numbers = #tpu.dot_dimension_numbers<[1], [0], [0], [1], [0, 0, 1, 1], [], []>} : vector<8x32xf32>, vector<32x32xf32>, vector<8x32xf32> -> vector<8x32xf32>
    %c0_10 = arith.constant 0 : index
    %c0_11 = arith.constant 0 : index
    %8 = vector.load %arg5[%c0_10, %c0_11] : memref<1x32xf32, #tpu.memory_space<vmem>>, vector<1x32xf32>
    %9 = vector.broadcast %8 : vector<1x32xf32> to vector<8x32xf32>
    %10 = arith.addf %7, %9 : vector<8x32xf32>
    %c0_12 = arith.constant 0 : index
    %c0_13 = arith.constant 0 : index
    %11 = vector.load %arg6[%c0_12, %c0_13] : memref<32x32xf32, #tpu.memory_space<vmem>>, vector<32x32xf32>
    %cst_14 = arith.constant dense<0.000000e+00> : vector<8x32xf32>
    %12 = tpu.matmul %3, %11, %cst_14 {dimension_numbers = #tpu.dot_dimension_numbers<[1], [0], [0], [1], [0, 0, 1, 1], [], []>} : vector<8x32xf32>, vector<32x32xf32>, vector<8x32xf32> -> vector<8x32xf32>
    %c0_15 = arith.constant 0 : index
    %c0_16 = arith.constant 0 : index
    %13 = vector.load %arg7[%c0_15, %c0_16] : memref<1x32xf32, #tpu.memory_space<vmem>>, vector<1x32xf32>
    %14 = vector.broadcast %13 : vector<1x32xf32> to vector<8x32xf32>
    %15 = arith.addf %12, %14 : vector<8x32xf32>
    %c0_17 = arith.constant 0 : index
    %c0_18 = arith.constant 0 : index
    %16 = vector.load %arg8[%c0_17, %c0_18] : memref<32x32xf32, #tpu.memory_space<vmem>>, vector<32x32xf32>
    %cst_19 = arith.constant dense<0.000000e+00> : vector<8x32xf32>
    %17 = tpu.matmul %5, %16, %cst_19 {dimension_numbers = #tpu.dot_dimension_numbers<[1], [0], [0], [1], [0, 0, 1, 1], [], []>} : vector<8x32xf32>, vector<32x32xf32>, vector<8x32xf32> -> vector<8x32xf32>
    %c0_20 = arith.constant 0 : index
    %c0_21 = arith.constant 0 : index
    %18 = vector.load %arg9[%c0_20, %c0_21] : memref<1x32xf32, #tpu.memory_space<vmem>>, vector<1x32xf32>
    %19 = vector.broadcast %18 : vector<1x32xf32> to vector<8x32xf32>
    %20 = arith.addf %17, %19 : vector<8x32xf32>
    %cst_22 = arith.constant 0.353553385 : f32
    %21 = vector.broadcast %cst_22 : f32 to vector<8x32xf32>
    %22 = arith.mulf %10, %21 : vector<8x32xf32>
    %23 = vector.extract_strided_slice %22 {offsets = [0, 0], sizes = [8, 8], strides = [1, 1]} : vector<8x32xf32> to vector<8x8xf32>
    %24 = vector.extract_strided_slice %15 {offsets = [0, 0], sizes = [8, 8], strides = [1, 1]} : vector<8x32xf32> to vector<8x8xf32>
    %25 = vector.extract_strided_slice %20 {offsets = [0, 0], sizes = [8, 8], strides = [1, 1]} : vector<8x32xf32> to vector<8x8xf32>
    %cst_23 = arith.constant dense<0.000000e+00> : vector<8x8xf32>
    %26 = tpu.matmul %23, %24, %cst_23 {dimension_numbers = #tpu.dot_dimension_numbers<[1], [1], [0], [0], [0, 0, 1, 0], [], []>} : vector<8x8xf32>, vector<8x8xf32>, vector<8x8xf32> -> vector<8x8xf32>
    %cst_24 = arith.constant dense<0xFF800000> : vector<8xf32>
    %27 = vector.multi_reduction <maximumf>, %26, %cst_24 [1] : vector<8x8xf32> to vector<8xf32>
    %28 = vector.shape_cast %27 : vector<8xf32> to vector<8x1xf32>
    %29 = vector.broadcast %28 : vector<8x1xf32> to vector<8x8xf32>
    %30 = arith.subf %26, %29 : vector<8x8xf32>
    %31 = math.exp %30 : vector<8x8xf32>
    %cst_25 = arith.constant dense<0.000000e+00> : vector<8xf32>
    %32 = vector.multi_reduction <add>, %31, %cst_25 [1] : vector<8x8xf32> to vector<8xf32>
    %33 = vector.shape_cast %32 : vector<8xf32> to vector<8x1xf32>
    %34 = tpu.reciprocal %33 {approx = true} : vector<8x1xf32> -> vector<8x1xf32>
    %35 = vector.broadcast %34 : vector<8x1xf32> to vector<8x8xf32>
    %36 = arith.mulf %31, %35 : vector<8x8xf32>
    %cst_26 = arith.constant dense<0.000000e+00> : vector<8x8xf32>
    %37 = tpu.matmul %36, %25, %cst_26 {dimension_numbers = #tpu.dot_dimension_numbers<[1], [0], [0], [1], [0, 0, 1, 1], [], []>} : vector<8x8xf32>, vector<8x8xf32>, vector<8x8xf32> -> vector<8x8xf32>
    %38 = vector.extract_strided_slice %22 {offsets = [0, 8], sizes = [8, 8], strides = [1, 1]} : vector<8x32xf32> to vector<8x8xf32>
    %39 = vector.extract_strided_slice %15 {offsets = [0, 8], sizes = [8, 8], strides = [1, 1]} : vector<8x32xf32> to vector<8x8xf32>
    %40 = vector.extract_strided_slice %20 {offsets = [0, 8], sizes = [8, 8], strides = [1, 1]} : vector<8x32xf32> to vector<8x8xf32>
    %cst_27 = arith.constant dense<0.000000e+00> : vector<8x8xf32>
    %41 = tpu.matmul %38, %39, %cst_27 {dimension_numbers = #tpu.dot_dimension_numbers<[1], [1], [0], [0], [0, 0, 1, 0], [], []>} : vector<8x8xf32>, vector<8x8xf32>, vector<8x8xf32> -> vector<8x8xf32>
    %cst_28 = arith.constant dense<0xFF800000> : vector<8xf32>
    %42 = vector.multi_reduction <maximumf>, %41, %cst_28 [1] : vector<8x8xf32> to vector<8xf32>
    %43 = vector.shape_cast %42 : vector<8xf32> to vector<8x1xf32>
    %44 = vector.broadcast %43 : vector<8x1xf32> to vector<8x8xf32>
    %45 = arith.subf %41, %44 : vector<8x8xf32>
    %46 = math.exp %45 : vector<8x8xf32>
    %cst_29 = arith.constant dense<0.000000e+00> : vector<8xf32>
    %47 = vector.multi_reduction <add>, %46, %cst_29 [1] : vector<8x8xf32> to vector<8xf32>
    %48 = vector.shape_cast %47 : vector<8xf32> to vector<8x1xf32>
    %49 = tpu.reciprocal %48 {approx = true} : vector<8x1xf32> -> vector<8x1xf32>
    %50 = vector.broadcast %49 : vector<8x1xf32> to vector<8x8xf32>
    %51 = arith.mulf %46, %50 : vector<8x8xf32>
    %cst_30 = arith.constant dense<0.000000e+00> : vector<8x8xf32>
    %52 = tpu.matmul %51, %40, %cst_30 {dimension_numbers = #tpu.dot_dimension_numbers<[1], [0], [0], [1], [0, 0, 1, 1], [], []>} : vector<8x8xf32>, vector<8x8xf32>, vector<8x8xf32> -> vector<8x8xf32>
    %53 = vector.extract_strided_slice %22 {offsets = [0, 16], sizes = [8, 8], strides = [1, 1]} : vector<8x32xf32> to vector<8x8xf32>
    %54 = vector.extract_strided_slice %15 {offsets = [0, 16], sizes = [8, 8], strides = [1, 1]} : vector<8x32xf32> to vector<8x8xf32>
    %55 = vector.extract_strided_slice %20 {offsets = [0, 16], sizes = [8, 8], strides = [1, 1]} : vector<8x32xf32> to vector<8x8xf32>
    %cst_31 = arith.constant dense<0.000000e+00> : vector<8x8xf32>
    %56 = tpu.matmul %53, %54, %cst_31 {dimension_numbers = #tpu.dot_dimension_numbers<[1], [1], [0], [0], [0, 0, 1, 0], [], []>} : vector<8x8xf32>, vector<8x8xf32>, vector<8x8xf32> -> vector<8x8xf32>
    %cst_32 = arith.constant dense<0xFF800000> : vector<8xf32>
    %57 = vector.multi_reduction <maximumf>, %56, %cst_32 [1] : vector<8x8xf32> to vector<8xf32>
    %58 = vector.shape_cast %57 : vector<8xf32> to vector<8x1xf32>
    %59 = vector.broadcast %58 : vector<8x1xf32> to vector<8x8xf32>
    %60 = arith.subf %56, %59 : vector<8x8xf32>
    %61 = math.exp %60 : vector<8x8xf32>
    %cst_33 = arith.constant dense<0.000000e+00> : vector<8xf32>
    %62 = vector.multi_reduction <add>, %61, %cst_33 [1] : vector<8x8xf32> to vector<8xf32>
    %63 = vector.shape_cast %62 : vector<8xf32> to vector<8x1xf32>
    %64 = tpu.reciprocal %63 {approx = true} : vector<8x1xf32> -> vector<8x1xf32>
    %65 = vector.broadcast %64 : vector<8x1xf32> to vector<8x8xf32>
    %66 = arith.mulf %61, %65 : vector<8x8xf32>
    %cst_34 = arith.constant dense<0.000000e+00> : vector<8x8xf32>
    %67 = tpu.matmul %66, %55, %cst_34 {dimension_numbers = #tpu.dot_dimension_numbers<[1], [0], [0], [1], [0, 0, 1, 1], [], []>} : vector<8x8xf32>, vector<8x8xf32>, vector<8x8xf32> -> vector<8x8xf32>
    %68 = vector.extract_strided_slice %22 {offsets = [0, 24], sizes = [8, 8], strides = [1, 1]} : vector<8x32xf32> to vector<8x8xf32>
    %69 = vector.extract_strided_slice %15 {offsets = [0, 24], sizes = [8, 8], strides = [1, 1]} : vector<8x32xf32> to vector<8x8xf32>
    %70 = vector.extract_strided_slice %20 {offsets = [0, 24], sizes = [8, 8], strides = [1, 1]} : vector<8x32xf32> to vector<8x8xf32>
    %cst_35 = arith.constant dense<0.000000e+00> : vector<8x8xf32>
    %71 = tpu.matmul %68, %69, %cst_35 {dimension_numbers = #tpu.dot_dimension_numbers<[1], [1], [0], [0], [0, 0, 1, 0], [], []>} : vector<8x8xf32>, vector<8x8xf32>, vector<8x8xf32> -> vector<8x8xf32>
    %cst_36 = arith.constant dense<0xFF800000> : vector<8xf32>
    %72 = vector.multi_reduction <maximumf>, %71, %cst_36 [1] : vector<8x8xf32> to vector<8xf32>
    %73 = vector.shape_cast %72 : vector<8xf32> to vector<8x1xf32>
    %74 = vector.broadcast %73 : vector<8x1xf32> to vector<8x8xf32>
    %75 = arith.subf %71, %74 : vector<8x8xf32>
    %76 = math.exp %75 : vector<8x8xf32>
    %cst_37 = arith.constant dense<0.000000e+00> : vector<8xf32>
    %77 = vector.multi_reduction <add>, %76, %cst_37 [1] : vector<8x8xf32> to vector<8xf32>
    %78 = vector.shape_cast %77 : vector<8xf32> to vector<8x1xf32>
    %79 = tpu.reciprocal %78 {approx = true} : vector<8x1xf32> -> vector<8x1xf32>
    %80 = vector.broadcast %79 : vector<8x1xf32> to vector<8x8xf32>
    %81 = arith.mulf %76, %80 : vector<8x8xf32>
    %cst_38 = arith.constant dense<0.000000e+00> : vector<8x8xf32>
    %82 = tpu.matmul %81, %70, %cst_38 {dimension_numbers = #tpu.dot_dimension_numbers<[1], [0], [0], [1], [0, 0, 1, 1], [], []>} : vector<8x8xf32>, vector<8x8xf32>, vector<8x8xf32> -> vector<8x8xf32>
    %83 = tpu.concatenate %37, %52, %67, %82 in 1 : vector<8x8xf32>, vector<8x8xf32>, vector<8x8xf32>, vector<8x8xf32> -> vector<8x32xf32>
    %c0_39 = arith.constant 0 : index
    %c0_40 = arith.constant 0 : index
    %84 = vector.load %arg10[%c0_39, %c0_40] : memref<32x32xf32, #tpu.memory_space<vmem>>, vector<32x32xf32>
    %cst_41 = arith.constant dense<0.000000e+00> : vector<8x32xf32>
    %85 = tpu.matmul %83, %84, %cst_41 {dimension_numbers = #tpu.dot_dimension_numbers<[1], [0], [0], [1], [0, 0, 1, 1], [], []>} : vector<8x32xf32>, vector<32x32xf32>, vector<8x32xf32> -> vector<8x32xf32>
    %c0_42 = arith.constant 0 : index
    %c0_43 = arith.constant 0 : index
    %86 = vector.load %arg11[%c0_42, %c0_43] : memref<1x32xf32, #tpu.memory_space<vmem>>, vector<1x32xf32>
    %87 = vector.broadcast %86 : vector<1x32xf32> to vector<8x32xf32>
    %88 = arith.addf %85, %87 : vector<8x32xf32>
    %c0_44 = arith.constant 0 : index
    %c0_45 = arith.constant 0 : index
    %c0_46 = arith.constant 0 : index
    %89 = vector.load %arg12[%c0_44, %c0_45, %c0_46] : memref<1x8x32xf32, #tpu.memory_space<vmem>>, vector<1x8x32xf32>
    %90 = vector.shape_cast %89 : vector<1x8x32xf32> to vector<8x32xf32>
    %91 = vector.shape_cast %88 : vector<8x32xf32> to vector<1x8x32xf32>
    tpu.vector_store %arg12[%c0_44, %c0_45, %c0_46], %91 {strides = array<i32>} : memref<1x8x32xf32, #tpu.memory_space<vmem>>, vector<1x8x32xf32>,
    return
  }
  func.func @transform_0(%arg0: i32) -> (i32, i32, i32) {
    %c0_i32 = arith.constant 0 : i32
    %c0_i32_0 = arith.constant 0 : i32
    %c0_i32_1 = arith.constant 0 : i32
    return %arg0, %c0_i32, %c0_i32_0 : i32, i32, i32
  }
  func.func @transform_1(%arg0: i32) -> (i32, i32, i32) {
    %c0_i32 = arith.constant 0 : i32
    %c0_i32_0 = arith.constant 0 : i32
    %c0_i32_1 = arith.constant 0 : i32
    return %arg0, %c0_i32, %c0_i32_0 : i32, i32, i32
  }
  func.func @transform_2(%arg0: i32) -> (i32, i32, i32) {
    %c0_i32 = arith.constant 0 : i32
    %c0_i32_0 = arith.constant 0 : i32
    %c0_i32_1 = arith.constant 0 : i32
    return %arg0, %c0_i32, %c0_i32_0 : i32, i32, i32
  }
  func.func @transform_3(%arg0: i32) -> (i32, i32) {
    %c0_i32 = arith.constant 0 : i32
    %c0_i32_0 = arith.constant 0 : i32
    %c0_i32_1 = arith.constant 0 : i32
    return %c0_i32, %c0_i32_0 : i32, i32
  }
  func.func @transform_4(%arg0: i32) -> (i32, i32) {
    %c0_i32 = arith.constant 0 : i32
    %c0_i32_0 = arith.constant 0 : i32
    %c0_i32_1 = arith.constant 0 : i32
    return %c0_i32, %c0_i32_0 : i32, i32
  }
  func.func @transform_5(%arg0: i32) -> (i32, i32) {
    %c0_i32 = arith.constant 0 : i32
    %c0_i32_0 = arith.constant 0 : i32
    %c0_i32_1 = arith.constant 0 : i32
    return %c0_i32, %c0_i32_0 : i32, i32
  }
  func.func @transform_6(%arg0: i32) -> (i32, i32) {
    %c0_i32 = arith.constant 0 : i32
    %c0_i32_0 = arith.constant 0 : i32
    %c0_i32_1 = arith.constant 0 : i32
    return %c0_i32, %c0_i32_0 : i32, i32
  }
  func.func @transform_7(%arg0: i32) -> (i32, i32) {
    %c0_i32 = arith.constant 0 : i32
    %c0_i32_0 = arith.constant 0 : i32
    %c0_i32_1 = arith.constant 0 : i32
    return %c0_i32, %c0_i32_0 : i32, i32
  }
  func.func @transform_8(%arg0: i32) -> (i32, i32) {
    %c0_i32 = arith.constant 0 : i32
    %c0_i32_0 = arith.constant 0 : i32
    %c0_i32_1 = arith.constant 0 : i32
    return %c0_i32, %c0_i32_0 : i32, i32
  }
  func.func @transform_9(%arg0: i32) -> (i32, i32) {
    %c0_i32 = arith.constant 0 : i32
    %c0_i32_0 = arith.constant 0 : i32
    %c0_i32_1 = arith.constant 0 : i32
    return %c0_i32, %c0_i32_0 : i32, i32
  }
  func.func @transform_10(%arg0: i32) -> (i32, i32) {
    %c0_i32 = arith.constant 0 : i32
    %c0_i32_0 = arith.constant 0 : i32
    %c0_i32_1 = arith.constant 0 : i32
    return %c0_i32, %c0_i32_0 : i32, i32
  }
  func.func @transform_11(%arg0: i32) -> (i32, i32, i32) {
    %c0_i32 = arith.constant 0 : i32
    %c0_i32_0 = arith.constant 0 : i32
    %c0_i32_1 = arith.constant 0 : i32
    return %arg0, %c0_i32, %c0_i32_0 : i32, i32, i32
  }
}

</mosaic_0001>

<llo_original>
// kernel: tpu_custom_call.1
$region0: #{tpu_custom_call.1}
  #allocation0 [shape = 'u32[]', space=smem, size = 0x4, offset = 0x4, fixed_abs, tag = 'smem constant byte address 0x4 - core index']
  #allocation1 [shape = 'u32[72,128]{1,0:T(1,128)}', space=vmem, size = 0x9000, scoped, tag = 'internal scratch']
  %s0 = inlined_call_operand.hbm [shape: f32[2,8,32], index: 0, kind: input, shape index: {}]
  %s1 = inlined_call_operand.hbm [shape: f32[2,8,32], index: 1, kind: input, shape index: {}]
  %s2 = inlined_call_operand.hbm [shape: f32[2,8,32], index: 2, kind: input, shape index: {}]
  %s3 = inlined_call_operand.hbm [shape: f32[32,32], index: 3, kind: input, shape index: {}]
  %s4 = inlined_call_operand.vmem [shape: f32[1,32], index: 4, kind: input, shape index: {}]
  %s5 = inlined_call_operand.hbm [shape: f32[32,32], index: 5, kind: input, shape index: {}]
  %s6 = inlined_call_operand.vmem [shape: f32[1,32], index: 6, kind: input, shape index: {}]
  %s7 = inlined_call_operand.hbm [shape: f32[32,32], index: 7, kind: input, shape index: {}]
  %s8 = inlined_call_operand.vmem [shape: f32[1,32], index: 8, kind: input, shape index: {}]
  %s9 = inlined_call_operand.hbm [shape: f32[32,32], index: 9, kind: input, shape index: {}]
  %s10 = inlined_call_operand.vmem [shape: f32[1,32], index: 10, kind: input, shape index: {}]
  %s11 = inlined_call_operand.hbm [shape: f32[2,8,32], index: 11, kind: output, shape index: {}]
  %s12 = sld [smem:[#allocation0]]
  $region105: #{tpu_custom_call.1} parent=0
    _
  %s14 = ssub.s32 1, %s12
  %s15 = scalar_select 0, %s14, %s12
  $region1: #{tpu_custom_call.1} parent=0
    #allocation2 [shape = 'u8[8192]{0}', space=vmem, size = 0x2000, scoped, tag = 'input window, operand 0']
    #allocation3 [shape = 's32[2]{0}', space=sflag, size = 0x8, scoped, tag = 'scoped memory for tpu_custom_call.1']
    #allocation4 [shape = 's32[2]{0}', space=sflag, size = 0x8, scoped, tag = 'scoped memory for tpu_custom_call.1']
    #allocation5 [shape = 'u8[8192]{0}', space=vmem, size = 0x2000, scoped, tag = 'input window, operand 1']
    #allocation6 [shape = 's32[2]{0}', space=sflag, size = 0x8, scoped, tag = 'scoped memory for tpu_custom_call.1']
    #allocation7 [shape = 'u8[8192]{0}', space=vmem, size = 0x2000, scoped, tag = 'input window, operand 2']
    #allocation8 [shape = 'u8[16384]{0}', space=vmem, size = 0x4000, scoped, tag = 'input window, operand 3, single buffered']
    #allocation9 [shape = 's32[1]{0}', space=sflag, size = 0x4, scoped, tag = 'scoped memory for tpu_custom_call.1']
    #allocation10 [shape = 'u8[16384]{0}', space=vmem, size = 0x4000, scoped, tag = 'input window, operand 5, single buffered']
    #allocation11 [shape = 'u8[16384]{0}', space=vmem, size = 0x4000, scoped, tag = 'input window, operand 7, single buffered']
    #allocation12 [shape = 's32[1]{0}', space=sflag, size = 0x4, scoped, tag = 'scoped memory for tpu_custom_call.1']
    #allocation13 [shape = 'u8[16384]{0}', space=vmem, size = 0x4000, scoped, tag = 'input window, operand 9, single buffered']
    #allocation14 [shape = 'u8[8192]{0}', space=vmem, size = 0x2000, scoped, tag = 'output window, operand 0']
    %16 = vsyncpa [#allocation3], 0
    %s17 = scalar_lea.sflag [#allocation3], 1
    %18 = vsyncpa %s17, 0
    %19 = vsyncpa [#allocation6], 0
    %s20 = scalar_lea.sflag [#allocation6], 1
    %21 = vsyncpa %s20, 0
    %22 = vsyncpa [#allocation9], 0
    %23 = vsyncpa [#allocation12], 0
    %24 = vsyncpa [#allocation4], 0
    %s25 = scalar_lea.sflag [#allocation4], 1
    %26 = vsyncpa %s25, 0
    loop: start=0, step=1, limit=4
    $region2: #{tpu_custom_call.1} parent=1 // loop_pre_header
      _
    $region3: #{tpu_custom_call.1} parent=1 // loop_header
      %s28 = sphi 0, %s32
      %p29 = scmp.ge.s32.totalorder %s28, 4
      %s38 = sphi 0, %s40
      %s41 = sphi 0, %s38
      %s42 = sphi 0, %s41
      %s58 = sphi 0, %s42
      %s64 = sphi 0, %s66
      %s67 = sphi 0, %s64
      %s68 = sphi 0, %s67
      %s84 = sphi 0, %s68
      %s90 = sphi 0, %s92
      %s93 = sphi 0, %s90
      %s94 = sphi 0, %s93
      %s110 = sphi 0, %s94
      %s114 = sphi 0, %s114
      %s116 = sphi 0, %s114
      %s117 = sphi 0, %s116
      %s131 = sphi 0, %s117
      %s135 = sphi 0, %s135
      %s137 = sphi 0, %s135
      %s138 = sphi 0, %s137
      %s152 = sphi 0, %s138
      %s156 = sphi 0, %s156
      %s158 = sphi 0, %s156
      %s159 = sphi 0, %s158
      %s173 = sphi 0, %s159
      %s177 = sphi 0, %s177
      %s179 = sphi 0, %s177
      %s180 = sphi 0, %s179
      %s194 = sphi 0, %s180
      %s198 = sphi 0, %s198
      %s200 = sphi 0, %s198
      %s201 = sphi 0, %s200
      %s215 = sphi 0, %s201
      %s219 = sphi 0, %s219
      %s221 = sphi 0, %s219
      %s222 = sphi 0, %s221
      %s236 = sphi 0, %s222
      %s240 = sphi 0, %s240
      %s242 = sphi 0, %s240
      %s243 = sphi 0, %s242
      %s257 = sphi 0, %s243
      %s261 = sphi 0, %s261
      %s263 = sphi 0, %s261
      %s264 = sphi 0, %s263
      %s278 = sphi 0, %s264
      %s284 = sphi 0, %s286
      %s287 = sphi 0, %s284
      %s288 = sphi 0, %s287
      %s304 = sphi 0, %s288
    $region4: #{tpu_custom_call.1} parent=1 // loop_header_branch
      %31 = sbr.rel (%p29) target = $region8
    $region5: #{tpu_custom_call.1} parent=1 // loop_body
      %s33 = ssub.s32 %s28, 1
      %s34 = ssub.s32 %s28, 2
      %s35 = sadd.s32 %s28, 1
      %s36 = ssub.s32 %s28, %s35
      %p37 = scmp.eq.s32.totalorder %s36, 0
      %s39 = sadd.s32 %s38, 1
      %s40 = scalar_select %p37, %s38, %s39
      %p43 = pneg %p37
      %p44 = scmp.eq.s32.totalorder %s28, 1
      %p45 = por %p43, %p44
      %p46 = scmp.ne.s32.totalorder %s38, %s41
      %p47 = scmp.eq.s32.totalorder %s28, 0
      %p48 = por %p46, %p47
      %p49 = scmp.ne.s32.totalorder %s38, %s41
      %p50 = scmp.eq.s32.totalorder %s33, 1
      %p51 = por %p49, %p50
      %p52 = scmp.ne.s32.totalorder %s41, %s42
      %p53 = scmp.eq.s32.totalorder %s33, 0
      %p54 = por %p52, %p53
      %p55 = scmp.ne.s32.totalorder %s41, %s42
      %p56 = scmp.eq.s32.totalorder %s34, 1
      %p57 = por %p55, %p56
      %p59 = scmp.ne.s32.totalorder %s42, %s58
      %p60 = scmp.eq.s32.totalorder %s34, 0
      %p61 = por %p59, %p60
      %s62 = ssub.s32 %s28, %s35
      %p63 = scmp.eq.s32.totalorder %s62, 0
      %s65 = sadd.s32 %s64, 1
      %s66 = scalar_select %p63, %s64, %s65
      %p69 = pneg %p63
      %p70 = scmp.eq.s32.totalorder %s28, 1
      %p71 = por %p69, %p70
      %p72 = scmp.ne.s32.totalorder %s64, %s67
      %p73 = scmp.eq.s32.totalorder %s28, 0
      %p74 = por %p72, %p73
      %p75 = scmp.ne.s32.totalorder %s64, %s67
      %p76 = scmp.eq.s32.totalorder %s33, 1
      %p77 = por %p75, %p76
      %p78 = scmp.ne.s32.totalorder %s67, %s68
      %p79 = scmp.eq.s32.totalorder %s33, 0
      %p80 = por %p78, %p79
      %p81 = scmp.ne.s32.totalorder %s67, %s68
      %p82 = scmp.eq.s32.totalorder %s34, 1
      %p83 = por %p81, %p82
      %p85 = scmp.ne.s32.totalorder %s68, %s84
      %p86 = scmp.eq.s32.totalorder %s34, 0
      %p87 = por %p85, %p86
      %s88 = ssub.s32 %s28, %s35
      %p89 = scmp.eq.s32.totalorder %s88, 0
      %s91 = sadd.s32 %s90, 1
      %s92 = scalar_select %p89, %s90, %s91
      %p95 = pneg %p89
      %p96 = scmp.eq.s32.totalorder %s28, 1
      %p97 = por %p95, %p96
      %p98 = scmp.ne.s32.totalorder %s90, %s93
      %p99 = scmp.eq.s32.totalorder %s28, 0
      %p100 = por %p98, %p99
      %p101 = scmp.ne.s32.totalorder %s90, %s93
      %p102 = scmp.eq.s32.totalorder %s33, 1
      %p103 = por %p101, %p102
      %p104 = scmp.ne.s32.totalorder %s93, %s94
      %p105 = scmp.eq.s32.totalorder %s33, 0
      %p106 = por %p104, %p105
      %p107 = scmp.ne.s32.totalorder %s93, %s94
      %p108 = scmp.eq.s32.totalorder %s34, 1
      %p109 = por %p107, %p108
      %p111 = scmp.ne.s32.totalorder %s94, %s110
      %p112 = scmp.eq.s32.totalorder %s34, 0
      %p113 = por %p111, %p112
      %s115 = sadd.s32 %s114, 1
      %p118 = scmp.eq.s32.totalorder %s28, 1
      %p119 = scmp.ne.s32.totalorder %s114, %s116
      %p120 = scmp.eq.s32.totalorder %s28, 0
      %p121 = por %p119, %p120
      %p122 = scmp.ne.s32.totalorder %s114, %s116
      %p123 = scmp.eq.s32.totalorder %s33, 1
      %p124 = por %p122, %p123
      %p125 = scmp.ne.s32.totalorder %s116, %s117
      %p126 = scmp.eq.s32.totalorder %s33, 0
      %p127 = por %p125, %p126
      %p128 = scmp.ne.s32.totalorder %s116, %s117
      %p129 = scmp.eq.s32.totalorder %s34, 1
      %p130 = por %p128, %p129
      %p132 = scmp.ne.s32.totalorder %s117, %s131
      %p133 = scmp.eq.s32.totalorder %s34, 0
      %p134 = por %p132, %p133
      %s136 = sadd.s32 %s135, 1
      %p139 = scmp.eq.s32.totalorder %s28, 1
      %p140 = scmp.ne.s32.totalorder %s135, %s137
      %p141 = scmp.eq.s32.totalorder %s28, 0
      %p142 = por %p140, %p141
      %p143 = scmp.ne.s32.totalorder %s135, %s137
      %p144 = scmp.eq.s32.totalorder %s33, 1
      %p145 = por %p143, %p144
      %p146 = scmp.ne.s32.totalorder %s137, %s138
      %p147 = scmp.eq.s32.totalorder %s33, 0
      %p148 = por %p146, %p147
      %p149 = scmp.ne.s32.totalorder %s137, %s138
      %p150 = scmp.eq.s32.totalorder %s34, 1
      %p151 = por %p149, %p150
      %p153 = scmp.ne.s32.totalorder %s138, %s152
      %p154 = scmp.eq.s32.totalorder %s34, 0
      %p155 = por %p153, %p154
      %s157 = sadd.s32 %s156, 1
      %p160 = scmp.eq.s32.totalorder %s28, 1
      %p161 = scmp.ne.s32.totalorder %s156, %s158
      %p162 = scmp.eq.s32.totalorder %s28, 0
      %p163 = por %p161, %p162
      %p164 = scmp.ne.s32.totalorder %s156, %s158
      %p165 = scmp.eq.s32.totalorder %s33, 1
      %p166 = por %p164, %p165
      %p167 = scmp.ne.s32.totalorder %s158, %s159
      %p168 = scmp.eq.s32.totalorder %s33, 0
      %p169 = por %p167, %p168
      %p170 = scmp.ne.s32.totalorder %s158, %s159
      %p171 = scmp.eq.s32.totalorder %s34, 1
      %p172 = por %p170, %p171
      %p174 = scmp.ne.s32.totalorder %s159, %s173
      %p175 = scmp.eq.s32.totalorder %s34, 0
      %p176 = por %p174, %p175
      %s178 = sadd.s32 %s177, 1
      %p181 = scmp.eq.s32.totalorder %s28, 1
      %p182 = scmp.ne.s32.totalorder %s177, %s179
      %p183 = scmp.eq.s32.totalorder %s28, 0
      %p184 = por %p182, %p183
      %p185 = scmp.ne.s32.totalorder %s177, %s179
      %p186 = scmp.eq.s32.totalorder %s33, 1
      %p187 = por %p185, %p186
      %p188 = scmp.ne.s32.totalorder %s179, %s180
      %p189 = scmp.eq.s32.totalorder %s33, 0
      %p190 = por %p188, %p189
      %p191 = scmp.ne.s32.totalorder %s179, %s180
      %p192 = scmp.eq.s32.totalorder %s34, 1
      %p193 = por %p191, %p192
      %p195 = scmp.ne.s32.totalorder %s180, %s194
      %p196 = scmp.eq.s32.totalorder %s34, 0
      %p197 = por %p195, %p196
      %s199 = sadd.s32 %s198, 1
      %p202 = scmp.eq.s32.totalorder %s28, 1
      %p203 = scmp.ne.s32.totalorder %s198, %s200
      %p204 = scmp.eq.s32.totalorder %s28, 0
      %p205 = por %p203, %p204
      %p206 = scmp.ne.s32.totalorder %s198, %s200
      %p207 = scmp.eq.s32.totalorder %s33, 1
      %p208 = por %p206, %p207
      %p209 = scmp.ne.s32.totalorder %s200, %s201
      %p210 = scmp.eq.s32.totalorder %s33, 0
      %p211 = por %p209, %p210
      %p212 = scmp.ne.s32.totalorder %s200, %s201
      %p213 = scmp.eq.s32.totalorder %s34, 1
      %p214 = por %p212, %p213
      %p216 = scmp.ne.s32.totalorder %s201, %s215
      %p217 = scmp.eq.s32.totalorder %s34, 0
      %p218 = por %p216, %p217
      %s220 = sadd.s32 %s219, 1
      %p223 = scmp.eq.s32.totalorder %s28, 1
      %p224 = scmp.ne.s32.totalorder %s219, %s221
      %p225 = scmp.eq.s32.totalorder %s28, 0
      %p226 = por %p224, %p225
      %p227 = scmp.ne.s32.totalorder %s219, %s221
      %p228 = scmp.eq.s32.totalorder %s33, 1
      %p229 = por %p227, %p228
      %p230 = scmp.ne.s32.totalorder %s221, %s222
      %p231 = scmp.eq.s32.totalorder %s33, 0
      %p232 = por %p230, %p231
      %p233 = scmp.ne.s32.totalorder %s221, %s222
      %p234 = scmp.eq.s32.totalorder %s34, 1
      %p235 = por %p233, %p234
      %p237 = scmp.ne.s32.totalorder %s222, %s236
      %p238 = scmp.eq.s32.totalorder %s34, 0
      %p239 = por %p237, %p238
      %s241 = sadd.s32 %s240, 1
      %p244 = scmp.eq.s32.totalorder %s28, 1
      %p245 = scmp.ne.s32.totalorder %s240, %s242
      %p246 = scmp.eq.s32.totalorder %s28, 0
      %p247 = por %p245, %p246
      %p248 = scmp.ne.s32.totalorder %s240, %s242
      %p249 = scmp.eq.s32.totalorder %s33, 1
      %p250 = por %p248, %p249
      %p251 = scmp.ne.s32.totalorder %s242, %s243
      %p252 = scmp.eq.s32.totalorder %s33, 0
      %p253 = por %p251, %p252
      %p254 = scmp.ne.s32.totalorder %s242, %s243
      %p255 = scmp.eq.s32.totalorder %s34, 1
      %p256 = por %p254, %p255
      %p258 = scmp.ne.s32.totalorder %s243, %s257
      %p259 = scmp.eq.s32.totalorder %s34, 0
      %p260 = por %p258, %p259
      %s262 = sadd.s32 %s261, 1
      %p265 = scmp.eq.s32.totalorder %s28, 1
      %p266 = scmp.ne.s32.totalorder %s261, %s263
      %p267 = scmp.eq.s32.totalorder %s28, 0
      %p268 = por %p266, %p267
      %p269 = scmp.ne.s32.totalorder %s261, %s263
      %p270 = scmp.eq.s32.totalorder %s33, 1
      %p271 = por %p269, %p270
      %p272 = scmp.ne.s32.totalorder %s263, %s264
      %p273 = scmp.eq.s32.totalorder %s33, 0
      %p274 = por %p272, %p273
      %p275 = scmp.ne.s32.totalorder %s263, %s264
      %p276 = scmp.eq.s32.totalorder %s34, 1
      %p277 = por %p275, %p276
      %p279 = scmp.ne.s32.totalorder %s264, %s278
      %p280 = scmp.eq.s32.totalorder %s34, 0
      %p281 = por %p279, %p280
      %s282 = ssub.s32 %s28, %s35
      %p283 = scmp.eq.s32.totalorder %s282, 0
      %s285 = sadd.s32 %s284, 1
      %s286 = scalar_select %p283, %s284, %s285
      %p289 = pneg %p283
      %p290 = scmp.eq.s32.totalorder %s28, 1
      %p291 = por %p289, %p290
      %p292 = scmp.ne.s32.totalorder %s284, %s287
      %p293 = scmp.eq.s32.totalorder %s28, 0
      %p294 = por %p292, %p293
      %p295 = scmp.ne.s32.totalorder %s284, %s287
      %p296 = scmp.eq.s32.totalorder %s33, 1
      %p297 = por %p295, %p296
      %p298 = scmp.ne.s32.totalorder %s287, %s288
      %p299 = scmp.eq.s32.totalorder %s33, 0
      %p300 = por %p298, %p299
      %p301 = scmp.ne.s32.totalorder %s287, %s288
      %p302 = scmp.eq.s32.totalorder %s34, 1
      %p303 = por %p301, %p302
      %p305 = scmp.ne.s32.totalorder %s288, %s304
      %p306 = scmp.eq.s32.totalorder %s34, 0
      %p307 = por %p305, %p306
      %p308 = scmp.le.s32.totalorder 1, %s28
      %p309 = scmp.lt.s32.totalorder %s28, 3
      %p310 = pnand %p308, %p309
      %p311 = pneg %p310
      // Predicated region
      $region9: #{tpu_custom_call.1} parent=5 // pred_check
        _
      $region10: #{tpu_custom_call.1} parent=5 // pred_check_branch
        %313 = sbr.rel (%p310) target = $region12
      $region11: #{tpu_custom_call.1} parent=5 // pred_region
        %s314 = ssub.s32 %s28, 1
        // Predicated region
        $region13: #{tpu_custom_call.1} parent=11 // pred_check
          %p315 = pneg %p127
        $region14: #{tpu_custom_call.1} parent=11 // pred_check_branch
          %317 = sbr.rel (%p315) target = $region16
        $region15: #{tpu_custom_call.1} parent=11 // pred_region
          %319 = vsyncadd [#allocation9], 0
          %s320 = sshll.u32 %s3, 4
          %s321 = int_to_ptr.hbm [resolvable:$true] %s320
          %s322 = sshll.u32 [#allocation8], 4
          %s323 = int_to_ptr.vmem [resolvable:$true] %s322
          %328 = dma.hbm_to_vmem [thread:$0]  %s321, 512, %s323, [#allocation9], 128, 128, 8
        $region16: #{tpu_custom_call.1} parent=11 // pred_fallthru
          _
        // Predicated region
        $region17: #{tpu_custom_call.1} parent=11 // pred_check
          %p329 = pneg %p148
        $region18: #{tpu_custom_call.1} parent=11 // pred_check_branch
          %331 = sbr.rel (%p329) target = $region20
        $region19: #{tpu_custom_call.1} parent=11 // pred_region
          _
        $region20: #{tpu_custom_call.1} parent=11 // pred_fallthru
          _
        // Predicated region
        $region21: #{tpu_custom_call.1} parent=11 // pred_check
          %p332 = pneg %p169
        $region22: #{tpu_custom_call.1} parent=11 // pred_check_branch
          %334 = sbr.rel (%p332) target = $region24
        $region23: #{tpu_custom_call.1} parent=11 // pred_region
          %336 = vsyncadd [#allocation9], 0
          %s337 = sshll.u32 %s5, 4
          %s338 = int_to_ptr.hbm [resolvable:$true] %s337
          %s339 = sshll.u32 [#allocation10], 4
          %s340 = int_to_ptr.vmem [resolvable:$true] %s339
          %345 = dma.hbm_to_vmem [thread:$0]  %s338, 512, %s340, [#allocation9], 128, 128, 8
        $region24: #{tpu_custom_call.1} parent=11 // pred_fallthru
          _
        // Predicated region
        $region25: #{tpu_custom_call.1} parent=11 // pred_check
          %p346 = pneg %p190
        $region26: #{tpu_custom_call.1} parent=11 // pred_check_branch
          %348 = sbr.rel (%p346) target = $region28
        $region27: #{tpu_custom_call.1} parent=11 // pred_region
          _
        $region28: #{tpu_custom_call.1} parent=11 // pred_fallthru
          _
        // Predicated region
        $region29: #{tpu_custom_call.1} parent=11 // pred_check
          %p349 = pneg %p211
        $region30: #{tpu_custom_call.1} parent=11 // pred_check_branch
          %351 = sbr.rel (%p349) target = $region32
        $region31: #{tpu_custom_call.1} parent=11 // pred_region
          %353 = vsyncadd [#allocation12], 0
          %s354 = sshll.u32 %s7, 4
          %s355 = int_to_ptr.hbm [resolvable:$true] %s354
          %s356 = sshll.u32 [#allocation11], 4
          %s357 = int_to_ptr.vmem [resolvable:$true] %s356
          %362 = dma.hbm_to_vmem [thread:$0]  %s355, 512, %s357, [#allocation12], 128, 128, 8
        $region32: #{tpu_custom_call.1} parent=11 // pred_fallthru
          _
        // Predicated region
        $region33: #{tpu_custom_call.1} parent=11 // pred_check
          %p363 = pneg %p232
        $region34: #{tpu_custom_call.1} parent=11 // pred_check_branch
          %365 = sbr.rel (%p363) target = $region36
        $region35: #{tpu_custom_call.1} parent=11 // pred_region
          _
        $region36: #{tpu_custom_call.1} parent=11 // pred_fallthru
          _
        // Predicated region
        $region37: #{tpu_custom_call.1} parent=11 // pred_check
          %p366 = pneg %p253
        $region38: #{tpu_custom_call.1} parent=11 // pred_check_branch
          %368 = sbr.rel (%p366) target = $region40
        $region39: #{tpu_custom_call.1} parent=11 // pred_region
          %370 = vsyncadd [#allocation12], 0
          %s371 = sshll.u32 %s9, 4
          %s372 = int_to_ptr.hbm [resolvable:$true] %s371
          %s373 = sshll.u32 [#allocation13], 4
          %s374 = int_to_ptr.vmem [resolvable:$true] %s373
          %379 = dma.hbm_to_vmem [thread:$0]  %s372, 512, %s374, [#allocation12], 128, 128, 8
        $region40: #{tpu_custom_call.1} parent=11 // pred_fallthru
          _
        // Predicated region
        $region41: #{tpu_custom_call.1} parent=11 // pred_check
          %p380 = pneg %p274
        $region42: #{tpu_custom_call.1} parent=11 // pred_check_branch
          %382 = sbr.rel (%p380) target = $region44
        $region43: #{tpu_custom_call.1} parent=11 // pred_region
          _
        $region44: #{tpu_custom_call.1} parent=11 // pred_fallthru
          _
      $region12: #{tpu_custom_call.1} parent=5 // pred_fallthru
        _
      %p383 = scmp.lt.s32.totalorder %s28, 2
      // Predicated region
      $region45: #{tpu_custom_call.1} parent=5 // pred_check
        %p384 = pneg %p383
      $region46: #{tpu_custom_call.1} parent=5 // pred_check_branch
        %386 = sbr.rel (%p384) target = $region48
      $region47: #{tpu_custom_call.1} parent=5 // pred_region
        // Predicated region
        $region49: #{tpu_custom_call.1} parent=47 // pred_check
          %p387 = pneg %p48
        $region50: #{tpu_custom_call.1} parent=47 // pred_check_branch
          %389 = sbr.rel (%p387) target = $region52
        $region51: #{tpu_custom_call.1} parent=47 // pred_region
          %s390 = sand.u32 %s38, 1
          %s391 = scalar_lea.sflag [#allocation3], %s390
          %s392 = sand.u32 %s38, 1
          %s393 = smul.addr %s392, 8
          %s394 = scalar_lea.vmem [#allocation2], %s393
          %396 = vsyncadd %s391, 0
          %s397 = smul.addr %s28, 8
          %s398 = scalar_lea.hbm %s0, %s397
          %s400 = sshll.u32 %s398, 4
          %s401 = int_to_ptr.hbm [resolvable:$true] %s400
          %s402 = sshll.u32 %s394, 4
          %s403 = int_to_ptr.vmem [resolvable:$true] %s402
          %405 = dma.hbm_to_vmem [thread:$0]  %s401, 128, %s403, %s391
        $region52: #{tpu_custom_call.1} parent=47 // pred_fallthru
          _
        // Predicated region
        $region53: #{tpu_custom_call.1} parent=47 // pred_check
          %p406 = pneg %p74
        $region54: #{tpu_custom_call.1} parent=47 // pred_check_branch
          %408 = sbr.rel (%p406) target = $region56
        $region55: #{tpu_custom_call.1} parent=47 // pred_region
          %s409 = sand.u32 %s28, 1
          %s410 = scalar_lea.sflag [#allocation6], %s409
          %s411 = sand.u32 %s64, 1
          %s412 = smul.addr %s411, 8
          %s413 = scalar_lea.vmem [#allocation5], %s412
          %415 = vsyncadd %s410, 0
          %s416 = smul.addr %s28, 8
          %s417 = scalar_lea.hbm %s1, %s416
          %s419 = sshll.u32 %s417, 4
          %s420 = int_to_ptr.hbm [resolvable:$true] %s419
          %s421 = sshll.u32 %s413, 4
          %s422 = int_to_ptr.vmem [resolvable:$true] %s421
          %424 = dma.hbm_to_vmem [thread:$0]  %s420, 128, %s422, %s410
        $region56: #{tpu_custom_call.1} parent=47 // pred_fallthru
          _
        // Predicated region
        $region57: #{tpu_custom_call.1} parent=47 // pred_check
          %p425 = pneg %p100
        $region58: #{tpu_custom_call.1} parent=47 // pred_check_branch
          %427 = sbr.rel (%p425) target = $region60
        $region59: #{tpu_custom_call.1} parent=47 // pred_region
          %s428 = sand.u32 %s28, 1
          %s429 = scalar_lea.sflag [#allocation6], %s428
          %s430 = sand.u32 %s90, 1
          %s431 = smul.addr %s430, 8
          %s432 = scalar_lea.vmem [#allocation7], %s431
          %434 = vsyncadd %s429, 0
          %s435 = smul.addr %s28, 8
          %s436 = scalar_lea.hbm %s2, %s435
          %s438 = sshll.u32 %s436, 4
          %s439 = int_to_ptr.hbm [resolvable:$true] %s438
          %s440 = sshll.u32 %s432, 4
          %s441 = int_to_ptr.vmem [resolvable:$true] %s440
          %443 = dma.hbm_to_vmem [thread:$0]  %s439, 128, %s441, %s429
        $region60: #{tpu_custom_call.1} parent=47 // pred_fallthru
          _
      $region48: #{tpu_custom_call.1} parent=5 // pred_fallthru
        _
      %p444 = scmp.le.s32.totalorder 1, %s28
      %p445 = scmp.lt.s32.totalorder %s28, 3
      %p446 = pnand %p444, %p445
      %p447 = pneg %p446
      // Predicated region
      $region61: #{tpu_custom_call.1} parent=5 // pred_check
        _
      $region62: #{tpu_custom_call.1} parent=5 // pred_check_branch
        %449 = sbr.rel (%p446) target = $region64
      $region63: #{tpu_custom_call.1} parent=5 // pred_region
        %s450 = ssub.s32 %s28, 1
        %s451 = sand.u32 %s41, 1
        %s452 = scalar_lea.sflag [#allocation3], %s451
        %s453 = sand.u32 %s41, 1
        %s454 = smul.addr %s453, 8
        %s455 = scalar_lea.vmem [#allocation2], %s454
        // Predicated region
        $region65: #{tpu_custom_call.1} parent=63 // pred_check
          %p456 = pneg %p54
        $region66: #{tpu_custom_call.1} parent=63 // pred_check_branch
          %458 = sbr.rel (%p456) target = $region68
        $region67: #{tpu_custom_call.1} parent=63 // pred_region
          %460 = dma.done %s452, 128
        $region68: #{tpu_custom_call.1} parent=63 // pred_fallthru
          _
        %s461 = sand.u32 %s33, 1
        %s462 = scalar_lea.sflag [#allocation6], %s461
        %s463 = sand.u32 %s67, 1
        %s464 = smul.addr %s463, 8
        %s465 = scalar_lea.vmem [#allocation5], %s464
        // Predicated region
        $region69: #{tpu_custom_call.1} parent=63 // pred_check
          %p466 = pneg %p80
        $region70: #{tpu_custom_call.1} parent=63 // pred_check_branch
          %468 = sbr.rel (%p466) target = $region72
        $region71: #{tpu_custom_call.1} parent=63 // pred_region
          %470 = dma.done %s462, 128
        $region72: #{tpu_custom_call.1} parent=63 // pred_fallthru
          _
        %s471 = sand.u32 %s33, 1
        %s472 = scalar_lea.sflag [#allocation6], %s471
        %s473 = sand.u32 %s93, 1
        %s474 = smul.addr %s473, 8
        %s475 = scalar_lea.vmem [#allocation7], %s474
        // Predicated region
        $region73: #{tpu_custom_call.1} parent=63 // pred_check
          %p476 = pneg %p106
        $region74: #{tpu_custom_call.1} parent=63 // pred_check_branch
          %478 = sbr.rel (%p476) target = $region76
        $region75: #{tpu_custom_call.1} parent=63 // pred_region
          %480 = dma.done %s472, 128
        $region76: #{tpu_custom_call.1} parent=63 // pred_fallthru
          _
        // Predicated region
        $region77: #{tpu_custom_call.1} parent=63 // pred_check
          %p481 = pneg %p127
        $region78: #{tpu_custom_call.1} parent=63 // pred_check_branch
          %483 = sbr.rel (%p481) target = $region80
        $region79: #{tpu_custom_call.1} parent=63 // pred_region
          %485 = dma.done [#allocation9], 512
        $region80: #{tpu_custom_call.1} parent=63 // pred_fallthru
          _
        // Predicated region
        $region81: #{tpu_custom_call.1} parent=63 // pred_check
          %p486 = pneg %p169
        $region82: #{tpu_custom_call.1} parent=63 // pred_check_branch
          %488 = sbr.rel (%p486) target = $region84
        $region83: #{tpu_custom_call.1} parent=63 // pred_region
          %490 = dma.done [#allocation9], 512
        $region84: #{tpu_custom_call.1} parent=63 // pred_fallthru
          _
        // Predicated region
        $region85: #{tpu_custom_call.1} parent=63 // pred_check
          %p491 = pneg %p211
        $region86: #{tpu_custom_call.1} parent=63 // pred_check_branch
          %493 = sbr.rel (%p491) target = $region88
        $region87: #{tpu_custom_call.1} parent=63 // pred_region
          %495 = dma.done [#allocation12], 512
        $region88: #{tpu_custom_call.1} parent=63 // pred_fallthru
          _
        // Predicated region
        $region89: #{tpu_custom_call.1} parent=63 // pred_check
          %p496 = pneg %p253
        $region90: #{tpu_custom_call.1} parent=63 // pred_check_branch
          %498 = sbr.rel (%p496) target = $region92
        $region91: #{tpu_custom_call.1} parent=63 // pred_region
          %500 = dma.done [#allocation12], 512
        $region92: #{tpu_custom_call.1} parent=63 // pred_fallthru
          _
        %s501 = sand.u32 %s41, 1
        %s502 = scalar_lea.sflag [#allocation3], %s501
        %s503 = sand.u32 %s41, 1
        %s504 = smul.addr %s503, 8
        %s505 = scalar_lea.vmem [#allocation2], %s504
        %p506 = pneg %p54
        %p507 = pneg %p51
        %s508 = sand.u32 %s33, 1
        %s509 = scalar_lea.sflag [#allocation6], %s508
        %s510 = sand.u32 %s67, 1
        %s511 = smul.addr %s510, 8
        %s512 = scalar_lea.vmem [#allocation5], %s511
        %p513 = pneg %p80
        %p514 = pneg %p77
        %s515 = sand.u32 %s33, 1
        %s516 = scalar_lea.sflag [#allocation6], %s515
        %s517 = sand.u32 %s93, 1
        %s518 = smul.addr %s517, 8
        %s519 = scalar_lea.vmem [#allocation7], %s518
        %p520 = pneg %p106
        %p521 = pneg %p103
        %p522 = pneg %p127
        %p523 = pneg %p124
        %p524 = pneg %p148
        %p525 = pneg %p145
        %p526 = pneg %p169
        %p527 = pneg %p166
        %p528 = pneg %p190
        %p529 = pneg %p187
        %p530 = pneg %p211
        %p531 = pneg %p208
        %p532 = pneg %p232
        %p533 = pneg %p229
        %p534 = pneg %p253
        %p535 = pneg %p250
        %p536 = pneg %p274
        %p537 = pneg %p271
        %p538 = pneg %p300
        %p539 = pneg %p297
        %s540 = sand.u32 %s287, 1
        %s541 = scalar_lea.sflag [#allocation4], %s540
        %s542 = sand.u32 %s287, 1
        %s543 = smul.addr %s542, 8
        %s544 = scalar_lea.vmem [#allocation14], %s543
        %v545 = vld [vmem:[%s455] sm:$0xff]
        %v546 = vld [vmem:[%s465] sm:$0xff]
        %v547 = vld [vmem:[%s475] sm:$0xff]
        %v548 = vld [vmem:[#allocation8] sm:$0xff]
        %v549 = vld [vmem:[#allocation8 + $0x8] sm:$0xff]
        %v550 = vld [vmem:[#allocation8 + $0x10] sm:$0xff]
        %v551 = vld [vmem:[#allocation8 + $0x18] sm:$0xff]
        %v552 = vld [vmem:[%s4] sm:$0x1]
        %v554 = vperm.slane %v552, 0
        %vm556 = vcmask 261120
        %v558 = vsel %vm556, %v545, 0
        %560 = vmatpush.msra.mxu0 0.0
        %561 = vmatpush.msra.mxu0 0.0
        %562 = vmatpush.msra.mxu0 0.0
        %563 = vmatpush.msra.mxu0 0.0
        %564 = vmatpush.msra.mxu0 0.0
        %565 = vmatpush.msra.mxu0 0.0
        %566 = vmatpush.msra.mxu0 0.0
        %567 = vmatpush.msra.mxu0 0.0
        %568 = vmatpush.msra.mxu0 0.0
        %569 = vmatpush.msra.mxu0 0.0
        %570 = vmatpush.msra.mxu0 0.0
        %571 = vmatpush.msra.mxu0 0.0
        %572 = vmatpush.msra.mxu0 %v551
        %573 = vmatpush.msra.mxu0 %v550
        %574 = vmatpush.msra.mxu0 %v549
        %575 = vmatpush.msra.mxu0 %v548
        %576 = vmatmul.f32.gmra.mxu0 %v558
        %v577 = vpop.f32.mrf.mxu0
        %v578 = vadd.f32 %v554, %v577
        %579 = vdwg.mxu0
        %v580 = vld [vmem:[#allocation10] sm:$0xff]
        %v581 = vld [vmem:[#allocation10 + $0x8] sm:$0xff]
        %v582 = vld [vmem:[#allocation10 + $0x10] sm:$0xff]
        %v583 = vld [vmem:[#allocation10 + $0x18] sm:$0xff]
        %v584 = vld [vmem:[%s6] sm:$0x1]
        %v586 = vperm.slane %v584, 0
        %v589 = vsel %vm556, %v546, 0
        %591 = vmatpush.msra.mxu0 0.0
        %592 = vmatpush.msra.mxu0 0.0
        %593 = vmatpush.msra.mxu0 0.0
        %594 = vmatpush.msra.mxu0 0.0
        %595 = vmatpush.msra.mxu0 0.0
        %596 = vmatpush.msra.mxu0 0.0
        %597 = vmatpush.msra.mxu0 0.0
        %598 = vmatpush.msra.mxu0 0.0
        %599 = vmatpush.msra.mxu0 0.0
        %600 = vmatpush.msra.mxu0 0.0
        %601 = vmatpush.msra.mxu0 0.0
        %602 = vmatpush.msra.mxu0 0.0
        %603 = vmatpush.msra.mxu0 %v583
        %604 = vmatpush.msra.mxu0 %v582
        %605 = vmatpush.msra.mxu0 %v581
        %606 = vmatpush.msra.mxu0 %v580
        %607 = vmatmul.f32.gmra.mxu0 %v589
        %v608 = vpop.f32.mrf.mxu0
        %v609 = vadd.f32 %v586, %v608
        %610 = vdwg.mxu0
        %v611 = vld [vmem:[#allocation11] sm:$0xff]
        %v612 = vld [vmem:[#allocation11 + $0x8] sm:$0xff]
        %v613 = vld [vmem:[#allocation11 + $0x10] sm:$0xff]
        %v614 = vld [vmem:[#allocation11 + $0x18] sm:$0xff]
        %v615 = vld [vmem:[%s8] sm:$0x1]
        %v617 = vperm.slane %v615, 0
        %v620 = vsel %vm556, %v547, 0
        %622 = vmatpush.msra.mxu0 0.0
        %623 = vmatpush.msra.mxu0 0.0
        %624 = vmatpush.msra.mxu0 0.0
        %625 = vmatpush.msra.mxu0 0.0
        %626 = vmatpush.msra.mxu0 0.0
        %627 = vmatpush.msra.mxu0 0.0
        %628 = vmatpush.msra.mxu0 0.0
        %629 = vmatpush.msra.mxu0 0.0
        %630 = vmatpush.msra.mxu0 0.0
        %631 = vmatpush.msra.mxu0 0.0
        %632 = vmatpush.msra.mxu0 0.0
        %633 = vmatpush.msra.mxu0 0.0
        %634 = vmatpush.msra.mxu0 %v614
        %635 = vmatpush.msra.mxu0 %v613
        %636 = vmatpush.msra.mxu0 %v612
        %637 = vmatpush.msra.mxu0 %v611
        %638 = vmatmul.f32.gmra.mxu0 %v620
        %v639 = vpop.f32.mrf.mxu0
        %v640 = vadd.f32 %v617, %v639
        %641 = vdwg.mxu0
        %v642 = vmul.f32 %v578, 0.35355338
        %vm643 = vcmask 64512
        %v645 = vsel %vm643, %v642, 0
        %v648 = vsel %vm643, %v609, 0
        %650 = vmatpush.xpose.msra.mxu0 0.0
        %651 = vmatpush.xpose.msra.mxu0 0.0
        %652 = vmatpush.xpose.msra.mxu0 0.0
        %653 = vmatpush.xpose.msra.mxu0 0.0
        %654 = vmatpush.xpose.msra.mxu0 0.0
        %655 = vmatpush.xpose.msra.mxu0 0.0
        %656 = vmatpush.xpose.msra.mxu0 0.0
        %657 = vmatpush.xpose.msra.mxu0 0.0
        %658 = vmatpush.xpose.msra.mxu0 0.0
        %659 = vmatpush.xpose.msra.mxu0 0.0
        %660 = vmatpush.xpose.msra.mxu0 0.0
        %661 = vmatpush.xpose.msra.mxu0 0.0
        %662 = vmatpush.xpose.msra.mxu0 0.0
        %663 = vmatpush.xpose.msra.mxu0 0.0
        %664 = vmatpush.xpose.msra.mxu0 0.0
        %665 = vmatpush.xpose.msra.mxu0 %v648
        %666 = vmatmul.f32.gmra.mxu0 %v645
        %v667 = vpop.f32.mrf.mxu0
        %v668 = vadd.f32 0.0, %v667
        %669 = vdwg.mxu0
        %v670 = vsel %vm643, %v668, -inf
        %671 = vmax.xlane.f32.xlu0 %v670
        %v672 = vpop.xlane.xlu0 %671
        %v673 = vsub.f32 %v668, %v672
        %v674 = vmul.f32 %v673, 1.442695
        %v675 = vpow.pop %v674
        %v676 = vsel %vm643, %v675, 0.0
        %677 = vadd.xlane.f32.xlu0 %v676
        %v678 = vpop.xlane.xlu0 %677
        %v679 = vrcp.pop %v678
        %v680 = vmul.f32 %v675, %v679
        %v682 = vsel %vm643, %v680, 0
        %684 = vmatpush.msra.mxu0 0.0
        %685 = vmatpush.msra.mxu0 0.0
        %686 = vmatpush.msra.mxu0 0.0
        %687 = vmatpush.msra.mxu0 0.0
        %688 = vmatpush.msra.mxu0 0.0
        %689 = vmatpush.msra.mxu0 0.0
        %690 = vmatpush.msra.mxu0 0.0
        %691 = vmatpush.msra.mxu0 0.0
        %692 = vmatpush.msra.mxu0 0.0
        %693 = vmatpush.msra.mxu0 0.0
        %694 = vmatpush.msra.mxu0 0.0
        %695 = vmatpush.msra.mxu0 0.0
        %696 = vmatpush.msra.mxu0 0.0
        %697 = vmatpush.msra.mxu0 0.0
        %698 = vmatpush.msra.mxu0 0.0
        %699 = vmatpush.msra.mxu0 %v640
        %700 = vmatmul.f32.gmra.mxu0 %v682
        %v701 = vpop.f32.mrf.mxu0
        %v702 = vadd.f32 0.0, %v701
        %703 = vdwg.mxu0
        %704 = vrot.lane.b32.xlu0 %v642, 120
        %v705 = vpop.permute.xlu0 %704
        %706 = vrot.lane.b32.xlu0 %v609, 120
        %v707 = vpop.permute.xlu0 %706
        %v708 = vsel %vm643, %v705, 0
        %v710 = vsel %vm643, %v707, 0
        %712 = vmatpush.xpose.msra.mxu0 0.0
        %713 = vmatpush.xpose.msra.mxu0 0.0
        %714 = vmatpush.xpose.msra.mxu0 0.0
        %715 = vmatpush.xpose.msra.mxu0 0.0
        %716 = vmatpush.xpose.msra.mxu0 0.0
        %717 = vmatpush.xpose.msra.mxu0 0.0
        %718 = vmatpush.xpose.msra.mxu0 0.0
        %719 = vmatpush.xpose.msra.mxu0 0.0
        %720 = vmatpush.xpose.msra.mxu0 0.0
        %721 = vmatpush.xpose.msra.mxu0 0.0
        %722 = vmatpush.xpose.msra.mxu0 0.0
        %723 = vmatpush.xpose.msra.mxu0 0.0
        %724 = vmatpush.xpose.msra.mxu0 0.0
        %725 = vmatpush.xpose.msra.mxu0 0.0
        %726 = vmatpush.xpose.msra.mxu0 0.0
        %727 = vmatpush.xpose.msra.mxu0 %v710
        %728 = vmatmul.f32.gmra.mxu0 %v708
        %v729 = vpop.f32.mrf.mxu0
        %v730 = vadd.f32 0.0, %v729
        %731 = vdwg.mxu0
        %v732 = vsel %vm643, %v730, -inf
        %733 = vmax.xlane.f32.xlu0 %v732
        %v734 = vpop.xlane.xlu0 %733
        %v735 = vsub.f32 %v730, %v734
        %v736 = vmul.f32 %v735, 1.442695
        %v737 = vpow.pop %v736
        %v738 = vsel %vm643, %v737, 0.0
        %739 = vadd.xlane.f32.xlu0 %v738
        %v740 = vpop.xlane.xlu0 %739
        %v741 = vrcp.pop %v740
        %v742 = vmul.f32 %v737, %v741
        %744 = vrot.lane.b32.xlu0 %v640, 120
        %v745 = vpop.permute.xlu0 %744
        %v748 = vsel %vm643, %v742, 0
        %750 = vmatpush.msra.mxu0 0.0
        %751 = vmatpush.msra.mxu0 0.0
        %752 = vmatpush.msra.mxu0 0.0
        %753 = vmatpush.msra.mxu0 0.0
        %754 = vmatpush.msra.mxu0 0.0
        %755 = vmatpush.msra.mxu0 0.0
        %756 = vmatpush.msra.mxu0 0.0
        %757 = vmatpush.msra.mxu0 0.0
        %758 = vmatpush.msra.mxu0 0.0
        %759 = vmatpush.msra.mxu0 0.0
        %760 = vmatpush.msra.mxu0 0.0
        %761 = vmatpush.msra.mxu0 0.0
        %762 = vmatpush.msra.mxu0 0.0
        %763 = vmatpush.msra.mxu0 0.0
        %764 = vmatpush.msra.mxu0 0.0
        %765 = vmatpush.msra.mxu0 %v745
        %766 = vmatmul.f32.gmra.mxu0 %v748
        %v767 = vpop.f32.mrf.mxu0
        %v768 = vadd.f32 0.0, %v767
        %769 = vdwg.mxu0
        %770 = vrot.lane.b32.xlu0 %v642, 112
        %v771 = vpop.permute.xlu0 %770
        %772 = vrot.lane.b32.xlu0 %v609, 112
        %v773 = vpop.permute.xlu0 %772
        %v774 = vsel %vm643, %v771, 0
        %v776 = vsel %vm643, %v773, 0
        %778 = vmatpush.xpose.msra.mxu0 0.0
        %779 = vmatpush.xpose.msra.mxu0 0.0
        %780 = vmatpush.xpose.msra.mxu0 0.0
        %781 = vmatpush.xpose.msra.mxu0 0.0
        %782 = vmatpush.xpose.msra.mxu0 0.0
        %783 = vmatpush.xpose.msra.mxu0 0.0
        %784 = vmatpush.xpose.msra.mxu0 0.0
        %785 = vmatpush.xpose.msra.mxu0 0.0
        %786 = vmatpush.xpose.msra.mxu0 0.0
        %787 = vmatpush.xpose.msra.mxu0 0.0
        %788 = vmatpush.xpose.msra.mxu0 0.0
        %789 = vmatpush.xpose.msra.mxu0 0.0
        %790 = vmatpush.xpose.msra.mxu0 0.0
        %791 = vmatpush.xpose.msra.mxu0 0.0
        %792 = vmatpush.xpose.msra.mxu0 0.0
        %793 = vmatpush.xpose.msra.mxu0 %v776
        %794 = vmatmul.f32.gmra.mxu0 %v774
        %v795 = vpop.f32.mrf.mxu0
        %v796 = vadd.f32 0.0, %v795
        %797 = vdwg.mxu0
        %v798 = vsel %vm643, %v796, -inf
        %799 = vmax.xlane.f32.xlu0 %v798
        %v800 = vpop.xlane.xlu0 %799
        %v801 = vsub.f32 %v796, %v800
        %v802 = vmul.f32 %v801, 1.442695
        %v803 = vpow.pop %v802
        %v804 = vsel %vm643, %v803, 0.0
        %805 = vadd.xlane.f32.xlu0 %v804
        %v806 = vpop.xlane.xlu0 %805
        %v807 = vrcp.pop %v806
        %v808 = vmul.f32 %v803, %v807
        %809 = vrot.lane.b32.xlu0 %v640, 112
        %v810 = vpop.permute.xlu0 %809
        %v813 = vsel %vm643, %v808, 0
        %815 = vmatpush.msra.mxu0 0.0
        %816 = vmatpush.msra.mxu0 0.0
        %817 = vmatpush.msra.mxu0 0.0
        %818 = vmatpush.msra.mxu0 0.0
        %819 = vmatpush.msra.mxu0 0.0
        %820 = vmatpush.msra.mxu0 0.0
        %821 = vmatpush.msra.mxu0 0.0
        %822 = vmatpush.msra.mxu0 0.0
        %823 = vmatpush.msra.mxu0 0.0
        %824 = vmatpush.msra.mxu0 0.0
        %825 = vmatpush.msra.mxu0 0.0
        %826 = vmatpush.msra.mxu0 0.0
        %827 = vmatpush.msra.mxu0 0.0
        %828 = vmatpush.msra.mxu0 0.0
        %829 = vmatpush.msra.mxu0 0.0
        %830 = vmatpush.msra.mxu0 %v810
        %831 = vmatmul.f32.gmra.mxu0 %v813
        %v832 = vpop.f32.mrf.mxu0
        %v833 = vadd.f32 0.0, %v832
        %834 = vdwg.mxu0
        %835 = vrot.lane.b32.xlu0 %v642, 104
        %v836 = vpop.permute.xlu0 %835
        %837 = vrot.lane.b32.xlu0 %v609, 104
        %v838 = vpop.permute.xlu0 %837
        %v839 = vsel %vm643, %v836, 0
        %v841 = vsel %vm643, %v838, 0
        %843 = vmatpush.xpose.msra.mxu0 0.0
        %844 = vmatpush.xpose.msra.mxu0 0.0
        %845 = vmatpush.xpose.msra.mxu0 0.0
        %846 = vmatpush.xpose.msra.mxu0 0.0
        %847 = vmatpush.xpose.msra.mxu0 0.0
        %848 = vmatpush.xpose.msra.mxu0 0.0
        %849 = vmatpush.xpose.msra.mxu0 0.0
        %850 = vmatpush.xpose.msra.mxu0 0.0
        %851 = vmatpush.xpose.msra.mxu0 0.0
        %852 = vmatpush.xpose.msra.mxu0 0.0
        %853 = vmatpush.xpose.msra.mxu0 0.0
        %854 = vmatpush.xpose.msra.mxu0 0.0
        %855 = vmatpush.xpose.msra.mxu0 0.0
        %856 = vmatpush.xpose.msra.mxu0 0.0
        %857 = vmatpush.xpose.msra.mxu0 0.0
        %858 = vmatpush.xpose.msra.mxu0 %v841
        %859 = vmatmul.f32.gmra.mxu0 %v839
        %v860 = vpop.f32.mrf.mxu0
        %v861 = vadd.f32 0.0, %v860
        %862 = vdwg.mxu0
        %v863 = vsel %vm643, %v861, -inf
        %864 = vmax.xlane.f32.xlu0 %v863
        %v865 = vpop.xlane.xlu0 %864
        %v866 = vsub.f32 %v861, %v865
        %v867 = vmul.f32 %v866, 1.442695
        %v868 = vpow.pop %v867
        %v869 = vsel %vm643, %v868, 0.0
        %870 = vadd.xlane.f32.xlu0 %v869
        %v871 = vpop.xlane.xlu0 %870
        %v872 = vrcp.pop %v871
        %v873 = vmul.f32 %v868, %v872
        %874 = vrot.lane.b32.xlu0 %v640, 104
        %v875 = vpop.permute.xlu0 %874
        %v878 = vsel %vm643, %v873, 0
        %880 = vmatpush.msra.mxu0 0.0
        %881 = vmatpush.msra.mxu0 0.0
        %882 = vmatpush.msra.mxu0 0.0
        %883 = vmatpush.msra.mxu0 0.0
        %884 = vmatpush.msra.mxu0 0.0
        %885 = vmatpush.msra.mxu0 0.0
        %886 = vmatpush.msra.mxu0 0.0
        %887 = vmatpush.msra.mxu0 0.0
        %888 = vmatpush.msra.mxu0 0.0
        %889 = vmatpush.msra.mxu0 0.0
        %890 = vmatpush.msra.mxu0 0.0
        %891 = vmatpush.msra.mxu0 0.0
        %892 = vmatpush.msra.mxu0 0.0
        %893 = vmatpush.msra.mxu0 0.0
        %894 = vmatpush.msra.mxu0 0.0
        %895 = vmatpush.msra.mxu0 %v875
        %896 = vmatmul.f32.gmra.mxu0 %v878
        %v897 = vpop.f32.mrf.mxu0
        %v898 = vadd.f32 0.0, %v897
        %899 = vdwg.mxu0
        %901 = vrot.lane.b32.xlu0 %v768, 8
        %v902 = vpop.permute.xlu0 %901
        %905 = vrot.lane.b32.xlu0 %v833, 16
        %v906 = vpop.permute.xlu0 %905
        %909 = vrot.lane.b32.xlu0 %v898, 24
        %v910 = vpop.permute.xlu0 %909
        %v912 = vsel %vm643, %v702, %v902
        %vm913 = vcmask 130048
        %v914 = vsel %vm913, %v912, %v906
        %vm915 = vcmask 195584
        %v916 = vsel %vm915, %v914, %v910
        %v917 = vld [vmem:[#allocation13] sm:$0xff]
        %v918 = vld [vmem:[#allocation13 + $0x8] sm:$0xff]
        %v919 = vld [vmem:[#allocation13 + $0x10] sm:$0xff]
        %v920 = vld [vmem:[#allocation13 + $0x18] sm:$0xff]
        %v921 = vld [vmem:[%s10] sm:$0x1]
        %v923 = vperm.slane %v921, 0
        %v926 = vsel %vm556, %v916, 0
        %928 = vmatpush.msra.mxu0 0.0
        %929 = vmatpush.msra.mxu0 0.0
        %930 = vmatpush.msra.mxu0 0.0
        %931 = vmatpush.msra.mxu0 0.0
        %932 = vmatpush.msra.mxu0 0.0
        %933 = vmatpush.msra.mxu0 0.0
        %934 = vmatpush.msra.mxu0 0.0
        %935 = vmatpush.msra.mxu0 0.0
        %936 = vmatpush.msra.mxu0 0.0
        %937 = vmatpush.msra.mxu0 0.0
        %938 = vmatpush.msra.mxu0 0.0
        %939 = vmatpush.msra.mxu0 0.0
        %940 = vmatpush.msra.mxu0 %v920
        %941 = vmatpush.msra.mxu0 %v919
        %942 = vmatpush.msra.mxu0 %v918
        %943 = vmatpush.msra.mxu0 %v917
        %944 = vmatmul.f32.gmra.mxu0 %v926
        %v945 = vpop.f32.mrf.mxu0
        %v946 = vadd.f32 %v923, %v945
        %947 = vdwg.mxu0
        %948 = vst.msk [vmem:[%s544] sm:$0xff] %vm556, %v946
        %s949 = sand.u32 %s287, 1
        %s950 = scalar_lea.sflag [#allocation4], %s949
        %s951 = sand.u32 %s287, 1
        %s952 = smul.addr %s951, 8
        %s953 = scalar_lea.vmem [#allocation14], %s952
        // Predicated region
        $region93: #{tpu_custom_call.1} parent=63 // pred_check
          %p954 = pneg %p297
        $region94: #{tpu_custom_call.1} parent=63 // pred_check_branch
          %956 = sbr.rel (%p954) target = $region96
        $region95: #{tpu_custom_call.1} parent=63 // pred_region
          %958 = vsyncadd %s950, 0
          %s959 = smul.addr %s33, 8
          %s960 = scalar_lea.hbm %s11, %s959
          %s962 = sshll.u32 %s953, 4
          %s963 = int_to_ptr.vmem [resolvable:$true] %s962
          %s964 = sshll.u32 %s960, 4
          %s965 = int_to_ptr.hbm [resolvable:$true] %s964
          %967 = dma.vmem_to_hbm [thread:$0]  %s963, 128, %s965, %s950
        $region96: #{tpu_custom_call.1} parent=63 // pred_fallthru
          _
      $region64: #{tpu_custom_call.1} parent=5 // pred_fallthru
        _
      %p968 = scmp.le.s32.totalorder 2, %s28
      // Predicated region
      $region97: #{tpu_custom_call.1} parent=5 // pred_check
        %p969 = pneg %p968
      $region98: #{tpu_custom_call.1} parent=5 // pred_check_branch
        %971 = sbr.rel (%p969) target = $region100
      $region99: #{tpu_custom_call.1} parent=5 // pred_region
        %s972 = ssub.s32 %s28, 2
        // Predicated region
        $region101: #{tpu_custom_call.1} parent=99 // pred_check
          %p973 = pneg %p303
        $region102: #{tpu_custom_call.1} parent=99 // pred_check_branch
          %975 = sbr.rel (%p973) target = $region104
        $region103: #{tpu_custom_call.1} parent=99 // pred_region
          %s976 = sand.u32 %s288, 1
          %s977 = scalar_lea.sflag [#allocation4], %s976
          %s978 = sand.u32 %s288, 1
          %s979 = smul.addr %s978, 8
          %s980 = scalar_lea.vmem [#allocation14], %s979
          %982 = dma.done %s977, 128
        $region104: #{tpu_custom_call.1} parent=99 // pred_fallthru
          _
      $region100: #{tpu_custom_call.1} parent=5 // pred_fallthru
        _
    $region6: #{tpu_custom_call.1} parent=1 // loop_footer
      %s32 = sadd.s32 1, %s28
    $region7: #{tpu_custom_call.1} parent=1 // loop_footer_branch
      %27 = sbr.rel target = $region3
    $region8: #{tpu_custom_call.1} parent=1 // loop_exit
      _
    %983 = vsyncpa [#allocation3], 1
    %s984 = scalar_lea.sflag [#allocation3], 1
    %985 = vsyncpa %s984, 1
    %986 = vsyncpa [#allocation6], 1
    %s987 = scalar_lea.sflag [#allocation6], 1
    %988 = vsyncpa %s987, 1
    %989 = vsyncpa [#allocation9], 1
    %990 = vsyncpa [#allocation12], 1
    %991 = vsyncpa [#allocation4], 1
    %s992 = scalar_lea.sflag [#allocation4], 1
    %993 = vsyncpa %s992, 1

</llo_original>
